<compile_context>
chip_gen: v6e
topology: v6e:2x2x1
jax: 0.10.0
libtpu: 0.0.40
codegen_flags: <defaults>
</compile_context>

<pallas_src>
import jax
import jax.numpy as jnp
from jax.experimental import pallas as pl
from jax.experimental.pallas import tpu as pltpu

LANE = 128


def _round_up(x, m):
    return (x + m - 1) // m * m


def _make_mlp_kernel(n_layers):
    """Build a kernel for `n_layers` Linear layers (ReLU between, Sigmoid last)."""

    def kernel(x_ref, *refs):
        o_ref = refs[-1]
        param_refs = refs[:-1]

        h = x_ref[...]                                          # bf16 [TB, D]
        for li in range(n_layers):
            w_ref = param_refs[2 * li]
            b_ref = param_refs[2 * li + 1]
            # bf16 operands -> MXU, f32 accumulate; bias/activation in f32 on
            # the VPU (f32 elementwise is the safe path on v5e as well).
            z = jnp.dot(h, w_ref[...],
                        preferred_element_type=jnp.float32) + b_ref[...]
            if li < n_layers - 1:
                # Linear + ReLU (Dropout = identity in eval mode)
                h = jnp.maximum(z, 0.0).astype(jnp.bfloat16)
            else:
                # Linear + Sigmoid, numerically stable.  Exact divide: only
                # out_dim real columns, negligible cost, avoids the approx
                # reciprocal error flagged in review.
                e = jnp.exp(-jnp.abs(z))
                num = jnp.where(z >= 0.0, 1.0, e)
                o_ref[...] = num / (1.0 + e)

    return kernel


def mlp_forward(x, params, *, tile_b_max=2048):
    """x: [B, input_dim] float32; params: list of (W[in,out] f32, b[1,out] f32)."""
    B, D = x.shape
    n_layers = len(params)
    out_dim = params[-1][0].shape[1]

    # ---- Batch tiling -------------------------------------------------------
    # Big tiles amortize per-grid-step overhead; round the tile so padding
    # stays within one sublane group (avoids ~2x padded-row traffic for
    # awkward batch sizes); keep the grid even when >1 so a v7x megacore can
    # split it across both TensorCores.
    num_tiles = max(1, -(-B // tile_b_max))
    if num_tiles > 1 and num_tiles % 2 != 0:
        num_tiles += 1
    tile_b = _round_up(-(-B // num_tiles), 8)
    B_pad = tile_b * num_tiles
    if B_pad != B:
        x = jnp.pad(x, ((0, B_pad - B), (0, 0)))

    x_bf = x.astype(jnp.bfloat16)

    # ---- Parameter preparation ---------------------------------------------
    # Zero-pad hidden widths to 128 (lane-dense activations between layers);
    # keep the input width D un-padded (padding it would inflate x HBM
    # traffic) and keep the final output width un-padded (minimal writeback).
    flat = []
    param_specs = []
    in_pad = D
    flops = 0
    for li, (w, b) in enumerate(params):
        k_real, n_real = w.shape
        k_pad = in_pad
        n_pad = n_real if li == n_layers - 1 else _round_up(n_real, LANE)
        if (k_pad, n_pad) != (k_real, n_real):
            w = jnp.pad(w, ((0, k_pad - k_real), (0, n_pad - n_real)))
            b = jnp.pad(b, ((0, 0), (0, n_pad - n_real)))
        w_bf = w.astype(jnp.bfloat16)
        b_f32 = b.astype(jnp.float32)
        flat.extend([w_bf, b_f32])
        # Constant index_map -> fetched once, VMEM-resident across the grid.
        # (pipeline_mode=pl.Buffered(1) would also drop the second buffer; the
        #  constant block index already avoids per-step re-DMA.)
        param_specs.append(pl.BlockSpec(w_bf.shape, lambda i: (0, 0)))
        param_specs.append(pl.BlockSpec(b_f32.shape, lambda i: (0, 0)))
        flops += 2 * B_pad * k_pad * n_pad
        in_pad = n_pad

    grid = (num_tiles,)
    x_spec = pl.BlockSpec((tile_b, D), lambda i: (i, 0))
    # out_dim equals the full array width -> contiguous HBM DMA, no lane pad.
    o_spec = pl.BlockSpec((tile_b, out_dim), lambda i: (i, 0))

    bytes_accessed = (x_bf.size * x_bf.dtype.itemsize
                      + sum(a.size * a.dtype.itemsize for a in flat)
                      + B_pad * out_dim * 4)
    cost = pl.CostEstimate(flops=flops,
                           transcendentals=B_pad * out_dim,
                           bytes_accessed=bytes_accessed)

    out = pl.pallas_call(
        _make_mlp_kernel(n_layers),
        out_shape=jax.ShapeDtypeStruct((B_pad, out_dim), jnp.float32),
        grid=grid,
        in_specs=[x_spec] + param_specs,
        out_specs=o_spec,
        compiler_params=pltpu.CompilerParams(
            dimension_semantics=("parallel",),
            # Conservative, portable to v7x's 64 MiB VMEM; per-tile buffers
            # (x: tile_b*D bf16, out: tile_b*out_dim f32, weights ~100 KiB)
            # stay far below this even double-buffered.
            vmem_limit_bytes=32 * 1024 * 1024,
        ),
        cost_estimate=cost,
    )(x_bf, *flat)

    return out[:B]


def _xavier_uniform(key, fan_in, fan_out):
    limit = jnp.sqrt(6.0 / (fan_in + fan_out))
    return jax.random.uniform(
        key, (fan_in, fan_out), dtype=jnp.float32, minval=-limit, maxval=limit
    )


def make_mlp_params(key, input_dim, output_dim, h_dim=128, num_layers=3):
    """Deterministic xavier-uniform weights, zero biases (initialize_weights('xavier'))."""
    dims = []
    curr_in, curr_out = input_dim, h_dim
    for _ in range(num_layers):
        dims.append((curr_in, curr_out))
        curr_in = curr_out
        curr_out = curr_out // 2
    dims.append((curr_in, output_dim))

    params = []
    keys = jax.random.split(key, len(dims))
    for k, (fi, fo) in zip(keys, dims):
        w = _xavier_uniform(k, fi, fo)
        b = jnp.zeros((1, fo), dtype=jnp.float32)
        params.append((w, b))
    return params


def mlp_reference_bf16(x, params):
    """Reference mirroring the kernel's bf16-operand / f32-accumulate math."""
    h = x.astype(jnp.bfloat16)
    out = None
    for i, (w, b) in enumerate(params):
        z = jnp.dot(h, w.astype(jnp.bfloat16),
                    preferred_element_type=jnp.float32) + b
        if i < len(params) - 1:
            h = jnp.maximum(z, 0.0).astype(jnp.bfloat16)
        else:
            out = jax.nn.sigmoid(z)
    return out


def mlp_reference_f32(x, params):
    h = x
    for i, (w, b) in enumerate(params):
        h = h @ w + b
        if i < len(params) - 1:
            h = jnp.maximum(h, 0.0)
        else:
            h = jax.nn.sigmoid(h)
    return h


if __name__ == "__main__":
    # Small shapes consistent with the module defaults (h_dim=128, num_layers=3).
    B, INPUT_DIM, OUTPUT_DIM = 8, 32, 16

    key = jax.random.PRNGKey(0)
    k_x, k_p = jax.random.split(key)

    x = jax.random.normal(k_x, (B, INPUT_DIM), dtype=jnp.float32)
    params = make_mlp_params(k_p, INPUT_DIM, OUTPUT_DIM)

    out = mlp_forward(x, params)
    out = jax.block_until_ready(out)

    assert out.shape == (B, OUTPUT_DIM), out.shape

    ref_bf16 = mlp_reference_bf16(x, params)
    assert jnp.allclose(out, ref_bf16, atol=2e-3, rtol=2e-3), \
        "mismatch vs bf16-matched reference"

    ref_f32 = mlp_reference_f32(x, params)
    assert jnp.allclose(out, ref_f32, atol=3e-2, rtol=3e-2), \
        "mismatch vs f32 reference"

    # TODO(synk): dropout uses eval-mode (identity) semantics; training-mode
    # stochastic masking would use pltpu.prng_seed / prng_random_bits in-kernel.
    print("KERNEL_OK")
</pallas_src>

<mosaic_0001>
module attributes {stable_mosaic.version = 11 : i64} {
  func.func @kernel(%arg0: i32, %arg1: memref<8x32xbf16, #tpu.memory_space<vmem>>, %arg2: memref<32x128xbf16, #tpu.memory_space<vmem>>, %arg3: memref<1x128xf32, #tpu.memory_space<vmem>>, %arg4: memref<128x128xbf16, #tpu.memory_space<vmem>>, %arg5: memref<1x128xf32, #tpu.memory_space<vmem>>, %arg6: memref<128x128xbf16, #tpu.memory_space<vmem>>, %arg7: memref<1x128xf32, #tpu.memory_space<vmem>>, %arg8: memref<128x16xbf16, #tpu.memory_space<vmem>>, %arg9: memref<1x16xf32, #tpu.memory_space<vmem>>, %arg10: memref<8x16xf32, #tpu.memory_space<vmem>>) attributes {dimension_semantics = [#tpu.dimension_semantics<parallel>], iteration_bounds = array<i64: 1>, scalar_prefetch = 0 : i64, scratch_operands = 0 : i64, tpu.core_type = #tpu.core_type<tc>, window_params = [{transform_indices = @transform_0, window_bounds = array<i64: 8, 32>}, {pipeline_mode = #tpu.pipeline_mode<synchronous>, transform_indices = @transform_1, window_bounds = array<i64: 32, 128>}, {pipeline_mode = #tpu.pipeline_mode<synchronous>, transform_indices = @transform_2, window_bounds = array<i64: 1, 128>}, {pipeline_mode = #tpu.pipeline_mode<synchronous>, transform_indices = @transform_3, window_bounds = array<i64: 128, 128>}, {pipeline_mode = #tpu.pipeline_mode<synchronous>, transform_indices = @transform_4, window_bounds = array<i64: 1, 128>}, {pipeline_mode = #tpu.pipeline_mode<synchronous>, transform_indices = @transform_5, window_bounds = array<i64: 128, 128>}, {pipeline_mode = #tpu.pipeline_mode<synchronous>, transform_indices = @transform_6, window_bounds = array<i64: 1, 128>}, {pipeline_mode = #tpu.pipeline_mode<synchronous>, transform_indices = @transform_7, window_bounds = array<i64: 128, 16>}, {pipeline_mode = #tpu.pipeline_mode<synchronous>, transform_indices = @transform_8, window_bounds = array<i64: 1, 16>}, {transform_indices = @transform_9, window_bounds = array<i64: 8, 16>}]} {
    %c0 = arith.constant 0 : index
    %c0_0 = arith.constant 0 : index
    %0 = vector.load %arg1[%c0, %c0_0] : memref<8x32xbf16, #tpu.memory_space<vmem>>, vector<8x32xbf16>
    %c0_1 = arith.constant 0 : index
    %c0_2 = arith.constant 0 : index
    %1 = vector.load %arg2[%c0_1, %c0_2] : memref<32x128xbf16, #tpu.memory_space<vmem>>, vector<32x128xbf16>
    %cst = arith.constant dense<0.000000e+00> : vector<8x128xf32>
    %2 = tpu.matmul %0, %1, %cst {dimension_numbers = #tpu.dot_dimension_numbers<[1], [0], [0], [1], [0, 0, 1, 1], [], []>} : vector<8x32xbf16>, vector<32x128xbf16>, vector<8x128xf32> -> vector<8x128xf32>
    %c0_3 = arith.constant 0 : index
    %c0_4 = arith.constant 0 : index
    %3 = vector.load %arg3[%c0_3, %c0_4] : memref<1x128xf32, #tpu.memory_space<vmem>>, vector<1x128xf32>
    %4 = vector.broadcast %3 : vector<1x128xf32> to vector<8x128xf32>
    %5 = arith.addf %2, %4 : vector<8x128xf32>
    %cst_5 = arith.constant 0.000000e+00 : f32
    %6 = vector.broadcast %cst_5 : f32 to vector<8x128xf32>
    %7 = arith.maximumf %5, %6 : vector<8x128xf32>
    %8 = arith.truncf %7 : vector<8x128xf32> to vector<8x128xbf16>
    %c0_6 = arith.constant 0 : index
    %c0_7 = arith.constant 0 : index
    %9 = vector.load %arg4[%c0_6, %c0_7] : memref<128x128xbf16, #tpu.memory_space<vmem>>, vector<128x128xbf16>
    %cst_8 = arith.constant dense<0.000000e+00> : vector<8x128xf32>
    %10 = tpu.matmul %8, %9, %cst_8 {dimension_numbers = #tpu.dot_dimension_numbers<[1], [0], [0], [1], [0, 0, 1, 1], [], []>} : vector<8x128xbf16>, vector<128x128xbf16>, vector<8x128xf32> -> vector<8x128xf32>
    %c0_9 = arith.constant 0 : index
    %c0_10 = arith.constant 0 : index
    %11 = vector.load %arg5[%c0_9, %c0_10] : memref<1x128xf32, #tpu.memory_space<vmem>>, vector<1x128xf32>
    %12 = vector.broadcast %11 : vector<1x128xf32> to vector<8x128xf32>
    %13 = arith.addf %10, %12 : vector<8x128xf32>
    %cst_11 = arith.constant 0.000000e+00 : f32
    %14 = vector.broadcast %cst_11 : f32 to vector<8x128xf32>
    %15 = arith.maximumf %13, %14 : vector<8x128xf32>
    %16 = arith.truncf %15 : vector<8x128xf32> to vector<8x128xbf16>
    %c0_12 = arith.constant 0 : index
    %c0_13 = arith.constant 0 : index
    %17 = vector.load %arg6[%c0_12, %c0_13] : memref<128x128xbf16, #tpu.memory_space<vmem>>, vector<128x128xbf16>
    %cst_14 = arith.constant dense<0.000000e+00> : vector<8x128xf32>
    %18 = tpu.matmul %16, %17, %cst_14 {dimension_numbers = #tpu.dot_dimension_numbers<[1], [0], [0], [1], [0, 0, 1, 1], [], []>} : vector<8x128xbf16>, vector<128x128xbf16>, vector<8x128xf32> -> vector<8x128xf32>
    %c0_15 = arith.constant 0 : index
    %c0_16 = arith.constant 0 : index
    %19 = vector.load %arg7[%c0_15, %c0_16] : memref<1x128xf32, #tpu.memory_space<vmem>>, vector<1x128xf32>
    %20 = vector.broadcast %19 : vector<1x128xf32> to vector<8x128xf32>
    %21 = arith.addf %18, %20 : vector<8x128xf32>
    %cst_17 = arith.constant 0.000000e+00 : f32
    %22 = vector.broadcast %cst_17 : f32 to vector<8x128xf32>
    %23 = arith.maximumf %21, %22 : vector<8x128xf32>
    %24 = arith.truncf %23 : vector<8x128xf32> to vector<8x128xbf16>
    %c0_18 = arith.constant 0 : index
    %c0_19 = arith.constant 0 : index
    %25 = vector.load %arg8[%c0_18, %c0_19] : memref<128x16xbf16, #tpu.memory_space<vmem>>, vector<128x16xbf16>
    %cst_20 = arith.constant dense<0.000000e+00> : vector<8x16xf32>
    %26 = tpu.matmul %24, %25, %cst_20 {dimension_numbers = #tpu.dot_dimension_numbers<[1], [0], [0], [1], [0, 0, 1, 1], [], []>} : vector<8x128xbf16>, vector<128x16xbf16>, vector<8x16xf32> -> vector<8x16xf32>
    %c0_21 = arith.constant 0 : index
    %c0_22 = arith.constant 0 : index
    %27 = vector.load %arg9[%c0_21, %c0_22] : memref<1x16xf32, #tpu.memory_space<vmem>>, vector<1x16xf32>
    %28 = vector.broadcast %27 : vector<1x16xf32> to vector<8x16xf32>
    %29 = arith.addf %26, %28 : vector<8x16xf32>
    %30 = math.absf %29 : vector<8x16xf32>
    %cst_23 = arith.constant 0.000000e+00 : f32
    %31 = vector.broadcast %cst_23 : f32 to vector<8x16xf32>
    %32 = arith.subf %31, %30 : vector<8x16xf32>
    %33 = math.exp %32 : vector<8x16xf32>
    %cst_24 = arith.constant 0.000000e+00 : f32
    %34 = vector.broadcast %cst_24 : f32 to vector<8x16xf32>
    %35 = arith.cmpf oge, %29, %34 : vector<8x16xf32>
    %cst_25 = arith.constant 1.000000e+00 : f32
    %36 = vector.broadcast %cst_25 : f32 to vector<8x16xf32>
    %37 = arith.select %35, %36, %33 : vector<8x16xi1>, vector<8x16xf32>
    %cst_26 = arith.constant 1.000000e+00 : f32
    %38 = vector.broadcast %cst_26 : f32 to vector<8x16xf32>
    %39 = arith.addf %38, %33 : vector<8x16xf32>
    %40 = arith.divf %37, %39 : vector<8x16xf32>
    %c0_27 = arith.constant 0 : index
    %c0_28 = arith.constant 0 : index
    %41 = vector.load %arg10[%c0_27, %c0_28] : memref<8x16xf32, #tpu.memory_space<vmem>>, vector<8x16xf32>
    tpu.vector_store %arg10[%c0_27, %c0_28], %40 {strides = array<i32>} : memref<8x16xf32, #tpu.memory_space<vmem>>, vector<8x16xf32>,
    return
  }
  func.func @transform_0(%arg0: i32) -> (i32, i32) {
    %c0_i32 = arith.constant 0 : i32
    %c0_i32_0 = arith.constant 0 : i32
    return %arg0, %c0_i32 : i32, i32
  }
  func.func @transform_1(%arg0: i32) -> (i32, i32) {
    %c0_i32 = arith.constant 0 : i32
    %c0_i32_0 = arith.constant 0 : i32
    %c0_i32_1 = arith.constant 0 : i32
    return %c0_i32, %c0_i32_0 : i32, i32
  }
  func.func @transform_2(%arg0: i32) -> (i32, i32) {
    %c0_i32 = arith.constant 0 : i32
    %c0_i32_0 = arith.constant 0 : i32
    %c0_i32_1 = arith.constant 0 : i32
    return %c0_i32, %c0_i32_0 : i32, i32
  }
  func.func @transform_3(%arg0: i32) -> (i32, i32) {
    %c0_i32 = arith.constant 0 : i32
    %c0_i32_0 = arith.constant 0 : i32
    %c0_i32_1 = arith.constant 0 : i32
    return %c0_i32, %c0_i32_0 : i32, i32
  }
  func.func @transform_4(%arg0: i32) -> (i32, i32) {
    %c0_i32 = arith.constant 0 : i32
    %c0_i32_0 = arith.constant 0 : i32
    %c0_i32_1 = arith.constant 0 : i32
    return %c0_i32, %c0_i32_0 : i32, i32
  }
  func.func @transform_5(%arg0: i32) -> (i32, i32) {
    %c0_i32 = arith.constant 0 : i32
    %c0_i32_0 = arith.constant 0 : i32
    %c0_i32_1 = arith.constant 0 : i32
    return %c0_i32, %c0_i32_0 : i32, i32
  }
  func.func @transform_6(%arg0: i32) -> (i32, i32) {
    %c0_i32 = arith.constant 0 : i32
    %c0_i32_0 = arith.constant 0 : i32
    %c0_i32_1 = arith.constant 0 : i32
    return %c0_i32, %c0_i32_0 : i32, i32
  }
  func.func @transform_7(%arg0: i32) -> (i32, i32) {
    %c0_i32 = arith.constant 0 : i32
    %c0_i32_0 = arith.constant 0 : i32
    %c0_i32_1 = arith.constant 0 : i32
    return %c0_i32, %c0_i32_0 : i32, i32
  }
  func.func @transform_8(%arg0: i32) -> (i32, i32) {
    %c0_i32 = arith.constant 0 : i32
    %c0_i32_0 = arith.constant 0 : i32
    %c0_i32_1 = arith.constant 0 : i32
    return %c0_i32, %c0_i32_0 : i32, i32
  }
  func.func @transform_9(%arg0: i32) -> (i32, i32) {
    %c0_i32 = arith.constant 0 : i32
    %c0_i32_0 = arith.constant 0 : i32
    return %arg0, %c0_i32 : i32, i32
  }
}

</mosaic_0001>

<llo_original>
// kernel: tpu_custom_call.1
$region0: #{tpu_custom_call.1}
  #allocation0 [shape = 'u32[]', space=smem, size = 0x4, offset = 0x4, fixed_abs, tag = 'smem constant byte address 0x4 - core index']
  #allocation1 [shape = 'u32[144,128]{1,0:T(1,128)}', space=vmem, size = 0x12000, scoped, tag = 'internal scratch']
  %s0 = inlined_call_operand.vmem [shape: bf16[8,32], index: 0, kind: input, shape index: {}]
  %s1 = inlined_call_operand.hbm [shape: bf16[32,128], index: 1, kind: input, shape index: {}]
  %s2 = inlined_call_operand.vmem [shape: f32[1,128], index: 2, kind: input, shape index: {}]
  %s3 = inlined_call_operand.vmem [shape: bf16[128,128], index: 3, kind: input, shape index: {}]
  %s4 = inlined_call_operand.vmem [shape: f32[1,128], index: 4, kind: input, shape index: {}]
  %s5 = inlined_call_operand.hbm [shape: bf16[128,128], index: 5, kind: input, shape index: {}]
  %s6 = inlined_call_operand.vmem [shape: f32[1,128], index: 6, kind: input, shape index: {}]
  %s7 = inlined_call_operand.vmem [shape: bf16[128,16], index: 7, kind: input, shape index: {}]
  %s8 = inlined_call_operand.vmem [shape: f32[1,16], index: 8, kind: input, shape index: {}]
  %s9 = inlined_call_operand.hbm [shape: f32[8,16], index: 9, kind: output, shape index: {}]
  %s10 = sld [smem:[#allocation0]]
  $region54: #{tpu_custom_call.1} parent=0
    _
  %s12 = ssub.s32 1, %s10
  %s13 = scalar_select 0, %s12, %s10
  $region1: #{tpu_custom_call.1} parent=0
    #allocation2 [shape = 'u8[8192]{0}', space=vmem, size = 0x2000, scoped, tag = 'input window, operand 1, single buffered']
    #allocation3 [shape = 's32[1]{0}', space=sflag, size = 0x4, scoped, tag = 'scoped memory for tpu_custom_call.1']
    #allocation4 [shape = 's32[1]{0}', space=sflag, size = 0x4, scoped, tag = 'scoped memory for tpu_custom_call.1']
    #allocation5 [shape = 'u8[32768]{0}', space=vmem, size = 0x8000, scoped, tag = 'input window, operand 5, single buffered']
    #allocation6 [shape = 's32[1]{0}', space=sflag, size = 0x4, scoped, tag = 'scoped memory for tpu_custom_call.1']
    #allocation7 [shape = 'u8[4096]{0}', space=vmem, size = 0x1000, scoped, tag = 'output window, operand 0, single buffered']
    %14 = vsyncpa [#allocation3], 0
    %15 = vsyncpa [#allocation6], 0
    %16 = vsyncpa [#allocation4], 0
    // Predicated region
    $region2: #{tpu_custom_call.1} parent=1 // pred_check
      _
    $region3: #{tpu_custom_call.1} parent=1 // pred_check_branch
      %18 = sbr.rel (0) target = $region5
    $region4: #{tpu_custom_call.1} parent=1 // pred_region
      _
    $region5: #{tpu_custom_call.1} parent=1 // pred_fallthru
      _
    // Predicated region
    $region6: #{tpu_custom_call.1} parent=1 // pred_check
      _
    $region7: #{tpu_custom_call.1} parent=1 // pred_check_branch
      %20 = sbr.rel (0) target = $region9
    $region8: #{tpu_custom_call.1} parent=1 // pred_region
      %s22 = ssub.s32 256, 256
      %23 = vsyncadd [#allocation3], %s22
      %s24 = sshll.u32 [#allocation2], 4
      %s25 = int_to_ptr.vmem [resolvable:$true] %s24
      %30 = dma.hbm_to_vmem [thread:$0]  %s1, 256, %s25, [#allocation3], 64, 64, 4
    $region9: #{tpu_custom_call.1} parent=1 // pred_fallthru
      _
    // Predicated region
    $region10: #{tpu_custom_call.1} parent=1 // pred_check
      _
    $region11: #{tpu_custom_call.1} parent=1 // pred_check_branch
      %32 = sbr.rel (0) target = $region13
    $region12: #{tpu_custom_call.1} parent=1 // pred_region
      _
    $region13: #{tpu_custom_call.1} parent=1 // pred_fallthru
      _
    // Predicated region
    $region14: #{tpu_custom_call.1} parent=1 // pred_check
      _
    $region15: #{tpu_custom_call.1} parent=1 // pred_check_branch
      %34 = sbr.rel (0) target = $region17
    $region16: #{tpu_custom_call.1} parent=1 // pred_region
      _
    $region17: #{tpu_custom_call.1} parent=1 // pred_fallthru
      _
    // Predicated region
    $region18: #{tpu_custom_call.1} parent=1 // pred_check
      _
    $region19: #{tpu_custom_call.1} parent=1 // pred_check_branch
      %36 = sbr.rel (0) target = $region21
    $region20: #{tpu_custom_call.1} parent=1 // pred_region
      _
    $region21: #{tpu_custom_call.1} parent=1 // pred_fallthru
      _
    // Predicated region
    $region22: #{tpu_custom_call.1} parent=1 // pred_check
      _
    $region23: #{tpu_custom_call.1} parent=1 // pred_check_branch
      %38 = sbr.rel (0) target = $region25
    $region24: #{tpu_custom_call.1} parent=1 // pred_region
      %s40 = ssub.s32 1024, 1024
      %41 = vsyncadd [#allocation6], %s40
      %s42 = sshll.u32 [#allocation5], 4
      %s43 = int_to_ptr.vmem [resolvable:$true] %s42
      %48 = dma.hbm_to_vmem [thread:$0]  %s5, 1024, %s43, [#allocation6], 64, 64, 4
    $region25: #{tpu_custom_call.1} parent=1 // pred_fallthru
      _
    // Predicated region
    $region26: #{tpu_custom_call.1} parent=1 // pred_check
      _
    $region27: #{tpu_custom_call.1} parent=1 // pred_check_branch
      %50 = sbr.rel (0) target = $region29
    $region28: #{tpu_custom_call.1} parent=1 // pred_region
      _
    $region29: #{tpu_custom_call.1} parent=1 // pred_fallthru
      _
    // Predicated region
    $region30: #{tpu_custom_call.1} parent=1 // pred_check
      _
    $region31: #{tpu_custom_call.1} parent=1 // pred_check_branch
      %52 = sbr.rel (0) target = $region33
    $region32: #{tpu_custom_call.1} parent=1 // pred_region
      _
    $region33: #{tpu_custom_call.1} parent=1 // pred_fallthru
      _
    // Predicated region
    $region34: #{tpu_custom_call.1} parent=1 // pred_check
      _
    $region35: #{tpu_custom_call.1} parent=1 // pred_check_branch
      %54 = sbr.rel (0) target = $region37
    $region36: #{tpu_custom_call.1} parent=1 // pred_region
      _
    $region37: #{tpu_custom_call.1} parent=1 // pred_fallthru
      _
    // Predicated region
    $region38: #{tpu_custom_call.1} parent=1 // pred_check
      _
    $region39: #{tpu_custom_call.1} parent=1 // pred_check_branch
      %56 = sbr.rel (0) target = $region41
    $region40: #{tpu_custom_call.1} parent=1 // pred_region
      %57 = dma.done [#allocation3], 256
    $region41: #{tpu_custom_call.1} parent=1 // pred_fallthru
      _
    // Predicated region
    $region42: #{tpu_custom_call.1} parent=1 // pred_check
      _
    $region43: #{tpu_custom_call.1} parent=1 // pred_check_branch
      %59 = sbr.rel (0) target = $region45
    $region44: #{tpu_custom_call.1} parent=1 // pred_region
      %60 = dma.done [#allocation6], 1024
    $region45: #{tpu_custom_call.1} parent=1 // pred_fallthru
      _
    %v62 = vld [vmem:[%s0] sm:$0xf]
    %v63 = vld [vmem:[#allocation2] sm:$0xf]
    %v64 = vld [vmem:[#allocation2 + $0x4] sm:$0xf]
    %v65 = vld [vmem:[#allocation2 + $0x8] sm:$0xf]
    %v66 = vld [vmem:[#allocation2 + $0xc] sm:$0xf]
    %v67 = vld [vmem:[%s2] sm:$0x1]
    %v69 = vlaneseq
    %v70 = vshrl.u32 %v69, 7
    %v71 = vsub.s32 0, %v70
    %v72 = vrot.slane %v67, %v71
    %v78 = vunpack.c.l.b16 %v63
    %v79 = vunpack.c.l.b16 %v64
    %v80 = vunpack.c.l.b16 %v65
    %v81 = vunpack.c.l.b16 %v66
    %v82 = vpack.c.b16 %v79, %v78
    %v83 = vpack.c.b16 %v81, %v80
    %vm86 = vcmask 261120
    %v88 = vsel %vm86, %v62, 0
    %90 = vmatprep.subr.bf16.mxu0 0
    %91 = vmatpush1.bf16.msra.mxu0 0
    %92 = vmatprep.subr.bf16.mxu0 0
    %93 = vmatpush1.bf16.msra.mxu0 0
    %94 = vmatprep.subr.bf16.mxu0 0
    %95 = vmatpush1.bf16.msra.mxu0 0
    %96 = vmatprep.subr.bf16.mxu0 0
    %97 = vmatpush1.bf16.msra.mxu0 0
    %98 = vmatprep.subr.bf16.mxu0 0
    %99 = vmatpush1.bf16.msra.mxu0 0
    %100 = vmatprep.subr.bf16.mxu0 0
    %101 = vmatpush1.bf16.msra.mxu0 0
    %102 = vmatprep.subr.bf16.mxu0 0
    %103 = vmatpush1.bf16.msra.mxu0 %v83
    %104 = vmatprep.subr.bf16.mxu0 0
    %105 = vmatpush1.bf16.msra.mxu0 %v82
    %106 = vmatprep.subr.bf16.mxu0 0
    %107 = vmatpush2.bf16.msra.mxu0 0
    %108 = vmatprep.subr.bf16.mxu0 0
    %109 = vmatpush2.bf16.msra.mxu0 0
    %110 = vmatprep.subr.bf16.mxu0 0
    %111 = vmatpush2.bf16.msra.mxu0 0
    %112 = vmatprep.subr.bf16.mxu0 0
    %113 = vmatpush2.bf16.msra.mxu0 0
    %114 = vmatprep.subr.bf16.mxu0 0
    %115 = vmatpush2.bf16.msra.mxu0 0
    %116 = vmatprep.subr.bf16.mxu0 0
    %117 = vmatpush2.bf16.msra.mxu0 0
    %118 = vmatprep.subr.bf16.mxu0 0
    %119 = vmatpush2.bf16.msra.mxu0 0
    %120 = vmatprep.subr.bf16.mxu0 0
    %121 = vmatpush2.bf16.msra.mxu0 0
    %122 = vmatprep.mubr.bf16.mxu0 0
    %123 = vmatmul.mubr.bf16.gmra.mxu0 %v88
    %v124 = vpop.f32.mrf.mxu0
    %v125 = vadd.f32 %v72, %v124
    %v126 = vpop.f32.mrf.mxu0
    %v127 = vpop.f32.mrf.mxu0
    %v128 = vpop.f32.mrf.mxu0
    %129 = vdwg.mxu0
    %v130 = vmax.f32 %v125, 0.0
    %v131 = vpack.c.bf16 %v130, %v130
    %v132 = vld [vmem:[%s3] sm:$0xf]
    %v133 = vld [vmem:[%s3 + $0x4] sm:$0xf]
    %v134 = vld [vmem:[%s3 + $0x8] sm:$0xf]
    %v135 = vld [vmem:[%s3 + $0xc] sm:$0xf]
    %v136 = vld [vmem:[%s3 + $0x10] sm:$0xf]
    %v137 = vld [vmem:[%s3 + $0x14] sm:$0xf]
    %v138 = vld [vmem:[%s3 + $0x18] sm:$0xf]
    %v139 = vld [vmem:[%s3 + $0x1c] sm:$0xf]
    %v140 = vld [vmem:[%s3 + $0x20] sm:$0xf]
    %v141 = vld [vmem:[%s3 + $0x24] sm:$0xf]
    %v142 = vld [vmem:[%s3 + $0x28] sm:$0xf]
    %v143 = vld [vmem:[%s3 + $0x2c] sm:$0xf]
    %v144 = vld [vmem:[%s3 + $0x30] sm:$0xf]
    %v145 = vld [vmem:[%s3 + $0x34] sm:$0xf]
    %v146 = vld [vmem:[%s3 + $0x38] sm:$0xf]
    %v147 = vld [vmem:[%s3 + $0x3c] sm:$0xf]
    %v148 = vld [vmem:[%s4] sm:$0x1]
    %v150 = vlaneseq
    %v151 = vshrl.u32 %v150, 7
    %v152 = vsub.s32 0, %v151
    %v153 = vrot.slane %v148, %v152
    %v171 = vunpack.c.l.b16 %v132
    %v172 = vunpack.c.l.b16 %v133
    %v173 = vunpack.c.l.b16 %v134
    %v174 = vunpack.c.l.b16 %v135
    %v175 = vunpack.c.l.b16 %v136
    %v176 = vunpack.c.l.b16 %v137
    %v177 = vunpack.c.l.b16 %v138
    %v178 = vunpack.c.l.b16 %v139
    %v179 = vunpack.c.l.b16 %v140
    %v180 = vunpack.c.l.b16 %v141
    %v181 = vunpack.c.l.b16 %v142
    %v182 = vunpack.c.l.b16 %v143
    %v183 = vunpack.c.l.b16 %v144
    %v184 = vunpack.c.l.b16 %v145
    %v185 = vunpack.c.l.b16 %v146
    %v186 = vunpack.c.l.b16 %v147
    %v187 = vpack.c.b16 %v172, %v171
    %v188 = vpack.c.b16 %v174, %v173
    %v189 = vpack.c.b16 %v176, %v175
    %v190 = vpack.c.b16 %v178, %v177
    %v191 = vpack.c.b16 %v180, %v179
    %v192 = vpack.c.b16 %v182, %v181
    %v193 = vpack.c.b16 %v184, %v183
    %v194 = vpack.c.b16 %v186, %v185
    %203 = vmatprep.subr.bf16.mxu0 0
    %204 = vmatpush1.bf16.msra.mxu0 %v194
    %205 = vmatprep.subr.bf16.mxu0 0
    %206 = vmatpush1.bf16.msra.mxu0 %v193
    %207 = vmatprep.subr.bf16.mxu0 0
    %208 = vmatpush1.bf16.msra.mxu0 %v192
    %209 = vmatprep.subr.bf16.mxu0 0
    %210 = vmatpush1.bf16.msra.mxu0 %v191
    %211 = vmatprep.subr.bf16.mxu0 0
    %212 = vmatpush1.bf16.msra.mxu0 %v190
    %213 = vmatprep.subr.bf16.mxu0 0
    %214 = vmatpush1.bf16.msra.mxu0 %v189
    %215 = vmatprep.subr.bf16.mxu0 0
    %216 = vmatpush1.bf16.msra.mxu0 %v188
    %217 = vmatprep.subr.bf16.mxu0 0
    %218 = vmatpush1.bf16.msra.mxu0 %v187
    %219 = vmatprep.subr.bf16.mxu0 0
    %220 = vmatpush2.bf16.msra.mxu0 0
    %221 = vmatprep.subr.bf16.mxu0 0
    %222 = vmatpush2.bf16.msra.mxu0 0
    %223 = vmatprep.subr.bf16.mxu0 0
    %224 = vmatpush2.bf16.msra.mxu0 0
    %225 = vmatprep.subr.bf16.mxu0 0
    %226 = vmatpush2.bf16.msra.mxu0 0
    %227 = vmatprep.subr.bf16.mxu0 0
    %228 = vmatpush2.bf16.msra.mxu0 0
    %229 = vmatprep.subr.bf16.mxu0 0
    %230 = vmatpush2.bf16.msra.mxu0 0
    %231 = vmatprep.subr.bf16.mxu0 0
    %232 = vmatpush2.bf16.msra.mxu0 0
    %233 = vmatprep.subr.bf16.mxu0 0
    %234 = vmatpush2.bf16.msra.mxu0 0
    %235 = vmatprep.mubr.bf16.mxu0 0
    %236 = vmatmul.mubr.bf16.gmra.mxu0 %v131
    %v237 = vpop.f32.mrf.mxu0
    %v238 = vadd.f32 %v153, %v237
    %v239 = vpop.f32.mrf.mxu0
    %v240 = vpop.f32.mrf.mxu0
    %v241 = vpop.f32.mrf.mxu0
    %242 = vdwg.mxu0
    %v243 = vmax.f32 %v238, 0.0
    %v244 = vpack.c.bf16 %v243, %v243
    %v245 = vld [vmem:[#allocation5] sm:$0xf]
    %v246 = vld [vmem:[#allocation5 + $0x4] sm:$0xf]
    %v247 = vld [vmem:[#allocation5 + $0x8] sm:$0xf]
    %v248 = vld [vmem:[#allocation5 + $0xc] sm:$0xf]
    %v249 = vld [vmem:[#allocation5 + $0x10] sm:$0xf]
    %v250 = vld [vmem:[#allocation5 + $0x14] sm:$0xf]
    %v251 = vld [vmem:[#allocation5 + $0x18] sm:$0xf]
    %v252 = vld [vmem:[#allocation5 + $0x1c] sm:$0xf]
    %v253 = vld [vmem:[#allocation5 + $0x20] sm:$0xf]
    %v254 = vld [vmem:[#allocation5 + $0x24] sm:$0xf]
    %v255 = vld [vmem:[#allocation5 + $0x28] sm:$0xf]
    %v256 = vld [vmem:[#allocation5 + $0x2c] sm:$0xf]
    %v257 = vld [vmem:[#allocation5 + $0x30] sm:$0xf]
    %v258 = vld [vmem:[#allocation5 + $0x34] sm:$0xf]
    %v259 = vld [vmem:[#allocation5 + $0x38] sm:$0xf]
    %v260 = vld [vmem:[#allocation5 + $0x3c] sm:$0xf]
    %v261 = vld [vmem:[%s6] sm:$0x1]
    %v263 = vlaneseq
    %v264 = vshrl.u32 %v263, 7
    %v265 = vsub.s32 0, %v264
    %v266 = vrot.slane %v261, %v265
    %v284 = vunpack.c.l.b16 %v245
    %v285 = vunpack.c.l.b16 %v246
    %v286 = vunpack.c.l.b16 %v247
    %v287 = vunpack.c.l.b16 %v248
    %v288 = vunpack.c.l.b16 %v249
    %v289 = vunpack.c.l.b16 %v250
    %v290 = vunpack.c.l.b16 %v251
    %v291 = vunpack.c.l.b16 %v252
    %v292 = vunpack.c.l.b16 %v253
    %v293 = vunpack.c.l.b16 %v254
    %v294 = vunpack.c.l.b16 %v255
    %v295 = vunpack.c.l.b16 %v256
    %v296 = vunpack.c.l.b16 %v257
    %v297 = vunpack.c.l.b16 %v258
    %v298 = vunpack.c.l.b16 %v259
    %v299 = vunpack.c.l.b16 %v260
    %v300 = vpack.c.b16 %v285, %v284
    %v301 = vpack.c.b16 %v287, %v286
    %v302 = vpack.c.b16 %v289, %v288
    %v303 = vpack.c.b16 %v291, %v290
    %v304 = vpack.c.b16 %v293, %v292
    %v305 = vpack.c.b16 %v295, %v294
    %v306 = vpack.c.b16 %v297, %v296
    %v307 = vpack.c.b16 %v299, %v298
    %316 = vmatprep.subr.bf16.mxu0 0
    %317 = vmatpush1.bf16.msra.mxu0 %v307
    %318 = vmatprep.subr.bf16.mxu0 0
    %319 = vmatpush1.bf16.msra.mxu0 %v306
    %320 = vmatprep.subr.bf16.mxu0 0
    %321 = vmatpush1.bf16.msra.mxu0 %v305
    %322 = vmatprep.subr.bf16.mxu0 0
    %323 = vmatpush1.bf16.msra.mxu0 %v304
    %324 = vmatprep.subr.bf16.mxu0 0
    %325 = vmatpush1.bf16.msra.mxu0 %v303
    %326 = vmatprep.subr.bf16.mxu0 0
    %327 = vmatpush1.bf16.msra.mxu0 %v302
    %328 = vmatprep.subr.bf16.mxu0 0
    %329 = vmatpush1.bf16.msra.mxu0 %v301
    %330 = vmatprep.subr.bf16.mxu0 0
    %331 = vmatpush1.bf16.msra.mxu0 %v300
    %332 = vmatprep.subr.bf16.mxu0 0
    %333 = vmatpush2.bf16.msra.mxu0 0
    %334 = vmatprep.subr.bf16.mxu0 0
    %335 = vmatpush2.bf16.msra.mxu0 0
    %336 = vmatprep.subr.bf16.mxu0 0
    %337 = vmatpush2.bf16.msra.mxu0 0
    %338 = vmatprep.subr.bf16.mxu0 0
    %339 = vmatpush2.bf16.msra.mxu0 0
    %340 = vmatprep.subr.bf16.mxu0 0
    %341 = vmatpush2.bf16.msra.mxu0 0
    %342 = vmatprep.subr.bf16.mxu0 0
    %343 = vmatpush2.bf16.msra.mxu0 0
    %344 = vmatprep.subr.bf16.mxu0 0
    %345 = vmatpush2.bf16.msra.mxu0 0
    %346 = vmatprep.subr.bf16.mxu0 0
    %347 = vmatpush2.bf16.msra.mxu0 0
    %348 = vmatprep.mubr.bf16.mxu0 0
    %349 = vmatmul.mubr.bf16.gmra.mxu0 %v244
    %v350 = vpop.f32.mrf.mxu0
    %v351 = vadd.f32 %v266, %v350
    %v352 = vpop.f32.mrf.mxu0
    %v353 = vpop.f32.mrf.mxu0
    %v354 = vpop.f32.mrf.mxu0
    %355 = vdwg.mxu0
    %v356 = vmax.f32 %v351, 0.0
    %v357 = vpack.c.bf16 %v356, %v356
    %v358 = vld [vmem:[%s7] sm:$0xf]
    %v359 = vld [vmem:[%s7 + $0x4] sm:$0xf]
    %v360 = vld [vmem:[%s7 + $0x8] sm:$0xf]
    %v361 = vld [vmem:[%s7 + $0xc] sm:$0xf]
    %v362 = vld [vmem:[%s7 + $0x10] sm:$0xf]
    %v363 = vld [vmem:[%s7 + $0x14] sm:$0xf]
    %v364 = vld [vmem:[%s7 + $0x18] sm:$0xf]
    %v365 = vld [vmem:[%s7 + $0x1c] sm:$0xf]
    %v366 = vld [vmem:[%s7 + $0x20] sm:$0xf]
    %v367 = vld [vmem:[%s7 + $0x24] sm:$0xf]
    %v368 = vld [vmem:[%s7 + $0x28] sm:$0xf]
    %v369 = vld [vmem:[%s7 + $0x2c] sm:$0xf]
    %v370 = vld [vmem:[%s7 + $0x30] sm:$0xf]
    %v371 = vld [vmem:[%s7 + $0x34] sm:$0xf]
    %v372 = vld [vmem:[%s7 + $0x38] sm:$0xf]
    %v373 = vld [vmem:[%s7 + $0x3c] sm:$0xf]
    %v374 = vld [vmem:[%s8] sm:$0x1]
    %v376 = vlaneseq
    %v377 = vshrl.u32 %v376, 7
    %v378 = vsub.s32 0, %v377
    %v379 = vrot.slane %v374, %v378
    %v397 = vunpack.c.l.b16 %v358
    %v398 = vunpack.c.l.b16 %v359
    %v399 = vunpack.c.l.b16 %v360
    %v400 = vunpack.c.l.b16 %v361
    %v401 = vunpack.c.l.b16 %v362
    %v402 = vunpack.c.l.b16 %v363
    %v403 = vunpack.c.l.b16 %v364
    %v404 = vunpack.c.l.b16 %v365
    %v405 = vunpack.c.l.b16 %v366
    %v406 = vunpack.c.l.b16 %v367
    %v407 = vunpack.c.l.b16 %v368
    %v408 = vunpack.c.l.b16 %v369
    %v409 = vunpack.c.l.b16 %v370
    %v410 = vunpack.c.l.b16 %v371
    %v411 = vunpack.c.l.b16 %v372
    %v412 = vunpack.c.l.b16 %v373
    %v413 = vpack.c.b16 %v398, %v397
    %v414 = vpack.c.b16 %v400, %v399
    %v415 = vpack.c.b16 %v402, %v401
    %v416 = vpack.c.b16 %v404, %v403
    %v417 = vpack.c.b16 %v406, %v405
    %v418 = vpack.c.b16 %v408, %v407
    %v419 = vpack.c.b16 %v410, %v409
    %v420 = vpack.c.b16 %v412, %v411
    %429 = vmatprep.subr.bf16.mxu0 0
    %430 = vmatpush1.bf16.msra.mxu0 %v420
    %431 = vmatprep.subr.bf16.mxu0 0
    %432 = vmatpush1.bf16.msra.mxu0 %v419
    %433 = vmatprep.subr.bf16.mxu0 0
    %434 = vmatpush1.bf16.msra.mxu0 %v418
    %435 = vmatprep.subr.bf16.mxu0 0
    %436 = vmatpush1.bf16.msra.mxu0 %v417
    %437 = vmatprep.subr.bf16.mxu0 0
    %438 = vmatpush1.bf16.msra.mxu0 %v416
    %439 = vmatprep.subr.bf16.mxu0 0
    %440 = vmatpush1.bf16.msra.mxu0 %v415
    %441 = vmatprep.subr.bf16.mxu0 0
    %442 = vmatpush1.bf16.msra.mxu0 %v414
    %443 = vmatprep.subr.bf16.mxu0 0
    %444 = vmatpush1.bf16.msra.mxu0 %v413
    %445 = vmatprep.subr.bf16.mxu0 0
    %446 = vmatpush2.bf16.msra.mxu0 0
    %447 = vmatprep.subr.bf16.mxu0 0
    %448 = vmatpush2.bf16.msra.mxu0 0
    %449 = vmatprep.subr.bf16.mxu0 0
    %450 = vmatpush2.bf16.msra.mxu0 0
    %451 = vmatprep.subr.bf16.mxu0 0
    %452 = vmatpush2.bf16.msra.mxu0 0
    %453 = vmatprep.subr.bf16.mxu0 0
    %454 = vmatpush2.bf16.msra.mxu0 0
    %455 = vmatprep.subr.bf16.mxu0 0
    %456 = vmatpush2.bf16.msra.mxu0 0
    %457 = vmatprep.subr.bf16.mxu0 0
    %458 = vmatpush2.bf16.msra.mxu0 0
    %459 = vmatprep.subr.bf16.mxu0 0
    %460 = vmatpush2.bf16.msra.mxu0 0
    %461 = vmatprep.mubr.bf16.mxu0 0
    %462 = vmatmul.mubr.bf16.gmra.mxu0 %v357
    %v463 = vpop.f32.mrf.mxu0
    %v464 = vadd.f32 %v379, %v463
    %v465 = vpop.f32.mrf.mxu0
    %v466 = vpop.f32.mrf.mxu0
    %v467 = vpop.f32.mrf.mxu0
    %468 = vdwg.mxu0
    %v469 = vand.u32 2147483647, %v464
    %v470 = vsub.f32 0.0, %v469
    %v471 = vmul.f32 %v470, 1.442695
    %v472 = vpow.pop %v471
    %vm473 = vcmp.ge.f32.partialorder %v464, 0.0
    %v474 = vsel %vm473, 1.0, %v472
    %v475 = vadd.f32 %v472, 1.0
    %v476 = vrcp.pop %v475
    %v477 = vmul.f32 %v474, %v476
    %vm478 = vcmask 130048
    %479 = vst.msk [vmem:[#allocation7] sm:$0xff] %vm478, %v477
    // Predicated region
    $region46: #{tpu_custom_call.1} parent=1 // pred_check
      _
    $region47: #{tpu_custom_call.1} parent=1 // pred_check_branch
      %481 = sbr.rel (0) target = $region49
    $region48: #{tpu_custom_call.1} parent=1 // pred_region
      %s483 = ssub.s32 128, 128
      %484 = vsyncadd [#allocation4], %s483
      %s486 = sshll.u32 [#allocation7], 4
      %s487 = int_to_ptr.vmem [resolvable:$true] %s486
      %489 = dma.vmem_to_hbm [thread:$0]  %s487, 128, %s9, [#allocation4]
    $region49: #{tpu_custom_call.1} parent=1 // pred_fallthru
      _
    // Predicated region
    $region50: #{tpu_custom_call.1} parent=1 // pred_check
      _
    $region51: #{tpu_custom_call.1} parent=1 // pred_check_branch
      %491 = sbr.rel (0) target = $region53
    $region52: #{tpu_custom_call.1} parent=1 // pred_region
      %492 = dma.done [#allocation4], 128
    $region53: #{tpu_custom_call.1} parent=1 // pred_fallthru
      _
    %493 = vsyncpa [#allocation3], 1
    %494 = vsyncpa [#allocation6], 1
    %495 = vsyncpa [#allocation4], 1

</llo_original>
